<compile_context>
chip_gen: v5e
topology: v5e:2x2
jax: 0.10.0
libtpu: 0.0.40
codegen_flags: <defaults>
</compile_context>

<pallas_src>
import functools

import jax
import jax.numpy as jnp
from jax import lax
from jax.experimental import pallas as pl
from jax.experimental.pallas import tpu as pltpu


_DIMS = (1, 16, 32, 32, 16, 3)   # layer widths, tanh after every Linear
_CHUNK = 512                     # inner lane chunk (multiple of 128, vreg-safe)
_ROWS = sum(_DIMS[1:])           # 99 rows in the packed weight slab
_COLS = max(_DIMS[:-1]) + 1      # 33 columns: [W | b], widest fan-in is 32


def _mlp_kernel(x_ref, w_ref, o_ref, *, act_dtype):
    """Whole 5-layer tanh MLP on one batch tile, batch on the 128-lane axis.

    x_ref: (1, tm)          activations, batch-last (lane-dense)
    w_ref: (99, 33)         all layers packed row-wise as [W | b]
    o_ref: (3, tm)          lane-dense output tile
    """
    # Static slices of the packed slab (row starts are multiples of 8).
    w1 = w_ref[0:16, 0:1];   b1 = w_ref[0:16, 1:2]      # Linear(1, 16)
    w2 = w_ref[16:48, 0:16]; b2 = w_ref[16:48, 16:17]   # Linear(16, 32)
    w3 = w_ref[48:80, 0:32]; b3 = w_ref[48:80, 32:33]   # Linear(32, 32)
    w4 = w_ref[80:96, 0:32]; b4 = w_ref[80:96, 32:33]   # Linear(32, 16)
    w5 = w_ref[96:99, 0:16]; b5 = w_ref[96:99, 16:17]   # Linear(16, 3)
    layers = ((w2, b2), (w3, b3), (w4, b4), (w5, b5))

    n_chunks = x_ref.shape[-1] // _CHUNK                 # static

    def body(c, carry):
        off = pl.multiple_of(c * _CHUNK, _CHUNK)
        x = x_ref[:, pl.ds(off, _CHUNK)]                 # (1, 512)

        # Layer 1 has K == 1: rank-1 broadcast multiply on the VPU (no MXU).
        h = jnp.tanh((w1 * x + b1).astype(act_dtype))    # (16, 512)

        # Remaining layers: H = tanh(W @ H + b), hidden dim on sublanes.
        for w_l, b_l in layers:
            z = jnp.dot(w_l, h.astype(jnp.float32),
                        preferred_element_type=jnp.float32) + b_l
            h = jnp.tanh(z.astype(act_dtype))

        o_ref[:, pl.ds(off, _CHUNK)] = h.astype(o_ref.dtype)   # (3, 512)
        return carry

    lax.fori_loop(0, n_chunks, body, 0, unroll=True)


def _pack_params(params):
    """Pack all (W, b) pairs (PyTorch layout) into one (99, 33) f32 slab."""
    slab = jnp.zeros((_ROWS, _COLS), jnp.float32)
    r = 0
    for w, b in params:
        out_d, in_d = w.shape
        slab = slab.at[r:r + out_d, :in_d].set(w.astype(jnp.float32))
        slab = slab.at[r:r + out_d, in_d:in_d + 1].set(
            b.astype(jnp.float32)[:, None])
        r += out_d
    return slab


def _choose_tile(n, tm):
    """Round tm to a multiple of the inner chunk and keep grid >= 2 blocks."""
    tm = max(_CHUNK, (tm // _CHUNK) * _CHUNK)
    while tm > _CHUNK and pl.cdiv(n, tm) < 2:
        tm -= _CHUNK
    return tm


def simple_nn_forward(x, params, *, tm=2048, batch_last=False,
                      use_bf16_tanh=False):
    """Forward pass of simple_NN.

    x:             (N, 1) float32 (PyTorch layout).
    params:        list of (W, b) in PyTorch layout: W (out, in), b (out,).
    tm:            requested batch tile (lanes per grid step); auto-adjusted.
    batch_last:    if True return (3, N) and skip the post-kernel transpose.
    use_bf16_tanh: run tanh in bf16 (v6e/v7x EUP win; loosens accuracy).
    Returns (N, 3) float32, or (3, N) if batch_last.
    """
    n, din = x.shape
    assert din == _DIMS[0] == 1
    dout = _DIMS[-1]

    tm = _choose_tile(n, tm)

    slab = _pack_params(params)                                   # (99, 33)

    # Batch on the lane (last) axis; pad N up to a multiple of the tile.
    n_pad = pl.cdiv(n, tm) * tm
    xt = jnp.pad(x.T.astype(jnp.float32), ((0, 0), (0, n_pad - n)))  # (1, n_pad)

    act_dtype = jnp.bfloat16 if use_bf16_tanh else jnp.float32
    kernel = functools.partial(_mlp_kernel, act_dtype=act_dtype)

    out_t = pl.pallas_call(
        kernel,
        out_shape=jax.ShapeDtypeStruct((dout, n_pad), jnp.float32),
        grid_spec=pltpu.PrefetchScalarGridSpec(
            num_scalar_prefetch=0,
            grid=(n_pad // tm,),
            in_specs=[
                pl.BlockSpec((1, tm), lambda i: (0, i)),
                pl.BlockSpec((_ROWS, _COLS), lambda i: (0, 0)),  # resident
            ],
            out_specs=pl.BlockSpec((dout, tm), lambda i: (0, i)),
        ),
        compiler_params=pltpu.CompilerParams(
            dimension_semantics=("parallel",)),  # shards batch across v7x TCs
    )(xt, slab)

    if batch_last:
        return out_t[:, :n]                                       # (3, N)
    return out_t[:, :n].T                                         # (N, 3)


def init_params(key):
    """PyTorch-default-like init: uniform(-1/sqrt(fan_in), +), PyTorch layout."""
    params = []
    for i in range(len(_DIMS) - 1):
        fan_in, fan_out = _DIMS[i], _DIMS[i + 1]
        key, kw, kb = jax.random.split(key, 3)
        bound = 1.0 / jnp.sqrt(jnp.float32(fan_in))
        w = jax.random.uniform(kw, (fan_out, fan_in), jnp.float32, -bound, bound)
        b = jax.random.uniform(kb, (fan_out,), jnp.float32, -bound, bound)
        params.append((w, b))
    return params


def reference_forward(x, params):
    h = x
    for w, b in params:
        h = jnp.tanh(h @ w.T + b)
    return h


if __name__ == "__main__":
    key = jax.random.PRNGKey(0)
    key, kx = jax.random.split(key)

    n = 1000  # not a multiple of the tile -> exercises padded tail + grid>=2
    x = jax.random.normal(kx, (n, 1), dtype=jnp.float32)

    params = init_params(key)

    out = simple_nn_forward(x, params)         # tm auto-shrinks -> grid = 2
    out = jax.block_until_ready(out)

    ref = reference_forward(x, params)
    assert out.shape == (n, 3)
    assert jnp.allclose(out, ref, atol=1e-5, rtol=1e-5), "mismatch vs reference"

    # Also exercise the transpose-free output path (layout-only difference).
    out_bl = jax.block_until_ready(simple_nn_forward(x, params, batch_last=True))
    assert out_bl.shape == (3, n)
    assert jnp.allclose(out_bl.T, ref, atol=1e-5, rtol=1e-5)

    print("KERNEL_OK")
</pallas_src>

<mosaic_0001>
module attributes {stable_mosaic.version = 11 : i64} {
  func.func @_mlp_kernel(%arg0: i32, %arg1: memref<1x512xf32, #tpu.memory_space<vmem>>, %arg2: memref<99x33xf32, #tpu.memory_space<vmem>>, %arg3: memref<3x512xf32, #tpu.memory_space<vmem>>) attributes {dimension_semantics = [#tpu.dimension_semantics<parallel>], iteration_bounds = array<i64: 2>, scalar_prefetch = 0 : i64, scratch_operands = 0 : i64, tpu.core_type = #tpu.core_type<tc>, window_params = [{transform_indices = @transform_0, window_bounds = array<i64: 1, 512>}, {pipeline_mode = #tpu.pipeline_mode<synchronous>, transform_indices = @transform_1, window_bounds = array<i64: 99, 33>}, {transform_indices = @transform_2, window_bounds = array<i64: 3, 512>}]} {
    %c0 = arith.constant 0 : index
    %c0_0 = arith.constant 0 : index
    %0 = vector.load %arg2[%c0, %c0_0] : memref<99x33xf32, #tpu.memory_space<vmem>>, vector<16x1xf32>
    %c0_1 = arith.constant 0 : index
    %c1 = arith.constant 1 : index
    %1 = vector.load %arg2[%c0_1, %c1] : memref<99x33xf32, #tpu.memory_space<vmem>>, vector<16x1xf32>
    %c16 = arith.constant 16 : index
    %c0_2 = arith.constant 0 : index
    %2 = vector.load %arg2[%c16, %c0_2] : memref<99x33xf32, #tpu.memory_space<vmem>>, vector<32x16xf32>
    %c16_3 = arith.constant 16 : index
    %c16_4 = arith.constant 16 : index
    %3 = vector.load %arg2[%c16_3, %c16_4] : memref<99x33xf32, #tpu.memory_space<vmem>>, vector<32x1xf32>
    %c48 = arith.constant 48 : index
    %c0_5 = arith.constant 0 : index
    %4 = vector.load %arg2[%c48, %c0_5] : memref<99x33xf32, #tpu.memory_space<vmem>>, vector<32x32xf32>
    %c48_6 = arith.constant 48 : index
    %c32 = arith.constant 32 : index
    %5 = vector.load %arg2[%c48_6, %c32] : memref<99x33xf32, #tpu.memory_space<vmem>>, vector<32x1xf32>
    %c80 = arith.constant 80 : index
    %c0_7 = arith.constant 0 : index
    %6 = vector.load %arg2[%c80, %c0_7] : memref<99x33xf32, #tpu.memory_space<vmem>>, vector<16x32xf32>
    %c80_8 = arith.constant 80 : index
    %c32_9 = arith.constant 32 : index
    %7 = vector.load %arg2[%c80_8, %c32_9] : memref<99x33xf32, #tpu.memory_space<vmem>>, vector<16x1xf32>
    %c96 = arith.constant 96 : index
    %c0_10 = arith.constant 0 : index
    %8 = vector.load %arg2[%c96, %c0_10] : memref<99x33xf32, #tpu.memory_space<vmem>>, vector<3x16xf32>
    %c96_11 = arith.constant 96 : index
    %c16_12 = arith.constant 16 : index
    %9 = vector.load %arg2[%c96_11, %c16_12] : memref<99x33xf32, #tpu.memory_space<vmem>>, vector<3x1xf32>
    %c0_i32 = arith.constant 0 : i32
    %c512_i32 = arith.constant 512 : i32
    %10 = arith.muli %c0_i32, %c512_i32 : i32
    %11 = tpu.assume_multiple %10, 512 : i32
    %c0_13 = arith.constant 0 : index
    %12 = arith.index_cast %11 : i32 to index
    %13 = vector.load %arg1[%c0_13, %12] : memref<1x512xf32, #tpu.memory_space<vmem>>, vector<1x512xf32>
    %14 = vector.broadcast %0 : vector<16x1xf32> to vector<16x512xf32>
    %15 = vector.broadcast %13 : vector<1x512xf32> to vector<16x512xf32>
    %16 = arith.mulf %14, %15 : vector<16x512xf32>
    %17 = vector.broadcast %1 : vector<16x1xf32> to vector<16x512xf32>
    %18 = arith.addf %16, %17 : vector<16x512xf32>
    %19 = math.tanh %18 : vector<16x512xf32>
    %cst = arith.constant dense<0.000000e+00> : vector<32x512xf32>
    %20 = tpu.matmul %2, %19, %cst {dimension_numbers = #tpu.dot_dimension_numbers<[1], [0], [0], [1], [0, 0, 1, 1], [], []>} : vector<32x16xf32>, vector<16x512xf32>, vector<32x512xf32> -> vector<32x512xf32>
    %21 = vector.broadcast %3 : vector<32x1xf32> to vector<32x512xf32>
    %22 = arith.addf %20, %21 : vector<32x512xf32>
    %23 = math.tanh %22 : vector<32x512xf32>
    %cst_14 = arith.constant dense<0.000000e+00> : vector<32x512xf32>
    %24 = tpu.matmul %4, %23, %cst_14 {dimension_numbers = #tpu.dot_dimension_numbers<[1], [0], [0], [1], [0, 0, 1, 1], [], []>} : vector<32x32xf32>, vector<32x512xf32>, vector<32x512xf32> -> vector<32x512xf32>
    %25 = vector.broadcast %5 : vector<32x1xf32> to vector<32x512xf32>
    %26 = arith.addf %24, %25 : vector<32x512xf32>
    %27 = math.tanh %26 : vector<32x512xf32>
    %cst_15 = arith.constant dense<0.000000e+00> : vector<16x512xf32>
    %28 = tpu.matmul %6, %27, %cst_15 {dimension_numbers = #tpu.dot_dimension_numbers<[1], [0], [0], [1], [0, 0, 1, 1], [], []>} : vector<16x32xf32>, vector<32x512xf32>, vector<16x512xf32> -> vector<16x512xf32>
    %29 = vector.broadcast %7 : vector<16x1xf32> to vector<16x512xf32>
    %30 = arith.addf %28, %29 : vector<16x512xf32>
    %31 = math.tanh %30 : vector<16x512xf32>
    %cst_16 = arith.constant dense<0.000000e+00> : vector<3x512xf32>
    %32 = tpu.matmul %8, %31, %cst_16 {dimension_numbers = #tpu.dot_dimension_numbers<[1], [0], [0], [1], [0, 0, 1, 1], [], []>} : vector<3x16xf32>, vector<16x512xf32>, vector<3x512xf32> -> vector<3x512xf32>
    %33 = vector.broadcast %9 : vector<3x1xf32> to vector<3x512xf32>
    %34 = arith.addf %32, %33 : vector<3x512xf32>
    %35 = math.tanh %34 : vector<3x512xf32>
    %c0_17 = arith.constant 0 : index
    %36 = arith.index_cast %11 : i32 to index
    %37 = vector.load %arg3[%c0_17, %36] : memref<3x512xf32, #tpu.memory_space<vmem>>, vector<3x512xf32>
    tpu.vector_store %arg3[%c0_17, %36], %35 {strides = array<i32>} : memref<3x512xf32, #tpu.memory_space<vmem>>, vector<3x512xf32>,
    %c1_i32 = arith.constant 1 : i32
    return
  }
  func.func @transform_0(%arg0: i32) -> (i32, i32) {
    %c0_i32 = arith.constant 0 : i32
    %c0_i32_0 = arith.constant 0 : i32
    return %c0_i32, %arg0 : i32, i32
  }
  func.func @transform_1(%arg0: i32) -> (i32, i32) {
    %c0_i32 = arith.constant 0 : i32
    %c0_i32_0 = arith.constant 0 : i32
    %c0_i32_1 = arith.constant 0 : i32
    return %c0_i32, %c0_i32_0 : i32, i32
  }
  func.func @transform_2(%arg0: i32) -> (i32, i32) {
    %c0_i32 = arith.constant 0 : i32
    %c0_i32_0 = arith.constant 0 : i32
    return %c0_i32, %arg0 : i32, i32
  }
}

</mosaic_0001>

<llo_original>
// kernel: tpu_custom_call.1
$region0: #{tpu_custom_call.1}
  #allocation0 [shape = 'u32[]', space=smem, size = 0x4, offset = 0x4, fixed_abs, tag = 'smem constant byte address 0x4 - core index']
  #allocation1 [shape = 'u32[72,128]{1,0:T(1,128)}', space=vmem, size = 0x9000, scoped, tag = 'internal scratch']
  %s0 = inlined_call_operand.vmem [shape: f32[1,1024], index: 0, kind: input, shape index: {}]
  %s1 = inlined_call_operand.vmem [shape: f32[99,33], index: 1, kind: input, shape index: {}]
  %s2 = inlined_call_operand.hbm [shape: f32[3,1024], index: 2, kind: output, shape index: {}]
  %s3 = sld [smem:[#allocation0]]
  $region41: #{tpu_custom_call.1} parent=0
    _
  %s5 = ssub.s32 1, %s3
  %s6 = scalar_select 0, %s5, %s3
  $region1: #{tpu_custom_call.1} parent=0
    #allocation2 [shape = 'u8[16384]{0}', space=vmem, size = 0x4000, scoped, tag = 'output window, operand 0']
    #allocation3 [shape = 's32[2]{0}', space=sflag, size = 0x8, scoped, tag = 'scoped memory for tpu_custom_call.1']
    %7 = vsyncpa [#allocation3], 0
    %s8 = scalar_lea.sflag [#allocation3], 1
    %9 = vsyncpa %s8, 0
    loop: start=0, step=1, limit=4
    $region2: #{tpu_custom_call.1} parent=1 // loop_pre_header
      _
    $region3: #{tpu_custom_call.1} parent=1 // loop_header
      %s11 = sphi 0, %s15
      %p12 = scmp.ge.s32.totalorder %s11, 4
      %s21 = sphi 0, %s23
      %s24 = sphi 0, %s21
      %s25 = sphi 0, %s24
      %s41 = sphi 0, %s25
      %s45 = sphi 0, %s45
      %s47 = sphi 0, %s45
      %s48 = sphi 0, %s47
      %s62 = sphi 0, %s48
      %s68 = sphi 0, %s70
      %s71 = sphi 0, %s68
      %s72 = sphi 0, %s71
      %s88 = sphi 0, %s72
    $region4: #{tpu_custom_call.1} parent=1 // loop_header_branch
      %14 = sbr.rel (%p12) target = $region8
    $region5: #{tpu_custom_call.1} parent=1 // loop_body
      %s16 = ssub.s32 %s11, 1
      %s17 = ssub.s32 %s11, 2
      %s18 = sadd.s32 %s11, 1
      %s19 = ssub.s32 %s11, %s18
      %p20 = scmp.eq.s32.totalorder %s19, 0
      %s22 = sadd.s32 %s21, 1
      %s23 = scalar_select %p20, %s21, %s22
      %p26 = pneg %p20
      %p27 = scmp.eq.s32.totalorder %s11, 1
      %p28 = por %p26, %p27
      %p29 = scmp.ne.s32.totalorder %s21, %s24
      %p30 = scmp.eq.s32.totalorder %s11, 0
      %p31 = por %p29, %p30
      %p32 = scmp.ne.s32.totalorder %s21, %s24
      %p33 = scmp.eq.s32.totalorder %s16, 1
      %p34 = por %p32, %p33
      %p35 = scmp.ne.s32.totalorder %s24, %s25
      %p36 = scmp.eq.s32.totalorder %s16, 0
      %p37 = por %p35, %p36
      %p38 = scmp.ne.s32.totalorder %s24, %s25
      %p39 = scmp.eq.s32.totalorder %s17, 1
      %p40 = por %p38, %p39
      %p42 = scmp.ne.s32.totalorder %s25, %s41
      %p43 = scmp.eq.s32.totalorder %s17, 0
      %p44 = por %p42, %p43
      %s46 = sadd.s32 %s45, 1
      %p49 = scmp.eq.s32.totalorder %s11, 1
      %p50 = scmp.ne.s32.totalorder %s45, %s47
      %p51 = scmp.eq.s32.totalorder %s11, 0
      %p52 = por %p50, %p51
      %p53 = scmp.ne.s32.totalorder %s45, %s47
      %p54 = scmp.eq.s32.totalorder %s16, 1
      %p55 = por %p53, %p54
      %p56 = scmp.ne.s32.totalorder %s47, %s48
      %p57 = scmp.eq.s32.totalorder %s16, 0
      %p58 = por %p56, %p57
      %p59 = scmp.ne.s32.totalorder %s47, %s48
      %p60 = scmp.eq.s32.totalorder %s17, 1
      %p61 = por %p59, %p60
      %p63 = scmp.ne.s32.totalorder %s48, %s62
      %p64 = scmp.eq.s32.totalorder %s17, 0
      %p65 = por %p63, %p64
      %s66 = ssub.s32 %s11, %s18
      %p67 = scmp.eq.s32.totalorder %s66, 0
      %s69 = sadd.s32 %s68, 1
      %s70 = scalar_select %p67, %s68, %s69
      %p73 = pneg %p67
      %p74 = scmp.eq.s32.totalorder %s11, 1
      %p75 = por %p73, %p74
      %p76 = scmp.ne.s32.totalorder %s68, %s71
      %p77 = scmp.eq.s32.totalorder %s11, 0
      %p78 = por %p76, %p77
      %p79 = scmp.ne.s32.totalorder %s68, %s71
      %p80 = scmp.eq.s32.totalorder %s16, 1
      %p81 = por %p79, %p80
      %p82 = scmp.ne.s32.totalorder %s71, %s72
      %p83 = scmp.eq.s32.totalorder %s16, 0
      %p84 = por %p82, %p83
      %p85 = scmp.ne.s32.totalorder %s71, %s72
      %p86 = scmp.eq.s32.totalorder %s17, 1
      %p87 = por %p85, %p86
      %p89 = scmp.ne.s32.totalorder %s72, %s88
      %p90 = scmp.eq.s32.totalorder %s17, 0
      %p91 = por %p89, %p90
      %p92 = scmp.le.s32.totalorder 1, %s11
      %p93 = scmp.lt.s32.totalorder %s11, 3
      %p94 = pnand %p92, %p93
      %p95 = pneg %p94
      // Predicated region
      $region9: #{tpu_custom_call.1} parent=5 // pred_check
        _
      $region10: #{tpu_custom_call.1} parent=5 // pred_check_branch
        %97 = sbr.rel (%p94) target = $region12
      $region11: #{tpu_custom_call.1} parent=5 // pred_region
        %s98 = ssub.s32 %s11, 1
        // Predicated region
        $region13: #{tpu_custom_call.1} parent=11 // pred_check
          %p99 = pneg %p58
        $region14: #{tpu_custom_call.1} parent=11 // pred_check_branch
          %101 = sbr.rel (%p99) target = $region16
        $region15: #{tpu_custom_call.1} parent=11 // pred_region
          _
        $region16: #{tpu_custom_call.1} parent=11 // pred_fallthru
          _
      $region12: #{tpu_custom_call.1} parent=5 // pred_fallthru
        _
      %p102 = scmp.lt.s32.totalorder %s11, 2
      // Predicated region
      $region17: #{tpu_custom_call.1} parent=5 // pred_check
        %p103 = pneg %p102
      $region18: #{tpu_custom_call.1} parent=5 // pred_check_branch
        %105 = sbr.rel (%p103) target = $region20
      $region19: #{tpu_custom_call.1} parent=5 // pred_region
        // Predicated region
        $region21: #{tpu_custom_call.1} parent=19 // pred_check
          %p106 = pneg %p31
        $region22: #{tpu_custom_call.1} parent=19 // pred_check_branch
          %108 = sbr.rel (%p106) target = $region24
        $region23: #{tpu_custom_call.1} parent=19 // pred_region
          %s109 = smul.u32 4, %s11
          %p110 = scmp.lt.s32.totalorder %s109, 7
          %s111 = scalar_select %p110, %s109, 7
          %s112 = scalar_lea.vmem %s0, %s111
          %s113 = smul.u32 4, %s11
        $region24: #{tpu_custom_call.1} parent=19 // pred_fallthru
          _
      $region20: #{tpu_custom_call.1} parent=5 // pred_fallthru
        _
      %p114 = scmp.le.s32.totalorder 1, %s11
      %p115 = scmp.lt.s32.totalorder %s11, 3
      %p116 = pnand %p114, %p115
      %p117 = pneg %p116
      // Predicated region
      $region25: #{tpu_custom_call.1} parent=5 // pred_check
        _
      $region26: #{tpu_custom_call.1} parent=5 // pred_check_branch
        %119 = sbr.rel (%p116) target = $region28
      $region27: #{tpu_custom_call.1} parent=5 // pred_region
        %s120 = ssub.s32 %s11, 1
        %s121 = smul.u32 4, %s16
        %p122 = scmp.lt.s32.totalorder %s121, 7
        %s123 = scalar_select %p122, %s121, 7
        %s124 = scalar_lea.vmem %s0, %s123
        %p125 = pneg %p37
        %p126 = pneg %p34
        %p127 = pneg %p58
        %p128 = pneg %p55
        %p129 = pneg %p84
        %p130 = pneg %p81
        %s131 = sand.u32 %s71, 1
        %s132 = scalar_lea.sflag [#allocation3], %s131
        %s133 = sand.u32 %s71, 1
        %s134 = smul.addr %s133, 16
        %s135 = scalar_lea.vmem [#allocation2], %s134
        %s136 = smul.u32 4, %s16
        %p137 = scmp.lt.s32.totalorder %s136, 7
        %s138 = scalar_select %p137, %s136, 7
        %s139 = scalar_lea.vmem %s0, %s138
        %s140 = smul.u32 4, %s16
        %s141 = smul.u32 4, %s16
        %v142 = vld [vmem:[%s1] sm:$0xff]
        %v143 = vld [vmem:[%s1 + $0x8] sm:$0xff]
        %v144 = vld [vmem:[%s1 + $0x10] sm:$0xff]
        %v145 = vld [vmem:[%s1 + $0x18] sm:$0xff]
        %v146 = vld [vmem:[%s1 + $0x20] sm:$0xff]
        %v147 = vld [vmem:[%s1 + $0x28] sm:$0xff]
        %v148 = vld [vmem:[%s1 + $0x30] sm:$0xff]
        %v149 = vld [vmem:[%s1 + $0x38] sm:$0xff]
        %v150 = vld [vmem:[%s1 + $0x40] sm:$0xff]
        %v151 = vld [vmem:[%s1 + $0x48] sm:$0xff]
        %v152 = vld [vmem:[%s1 + $0x50] sm:$0xff]
        %v153 = vld [vmem:[%s1 + $0x58] sm:$0xff]
        %v154 = vld [vmem:[%s1 + $0x60] sm:$0x7]
        %v155 = vld [vmem:[%s139] sm:$0xf]
        %157 = vset.pattern.permute.xlu0 0
        %158 = vperm.xlu0 %157, %v142
        %v159 = vpop.permute.xlu0 %158
        %162 = vset.pattern.permute.xlu0 0
        %163 = vperm.xlu0 %162, %v143
        %v164 = vpop.permute.xlu0 %163
        %v167 = vperm.slane %v155, 0
        %v168 = vperm.slane %v155, 1
        %v169 = vperm.slane %v155, 2
        %v170 = vperm.slane %v155, 3
        %v175 = vmul.f32 %v159, %v167
        %v176 = vmul.f32 %v159, %v168
        %v177 = vmul.f32 %v159, %v169
        %v178 = vmul.f32 %v159, %v170
        %v179 = vmul.f32 %v164, %v167
        %v180 = vmul.f32 %v164, %v168
        %v181 = vmul.f32 %v164, %v169
        %v182 = vmul.f32 %v164, %v170
        %183 = vset.pattern.permute.xlu0 1
        %184 = vperm.xlu0 %183, %v142
        %v185 = vpop.permute.xlu0 %184
        %187 = vset.pattern.permute.xlu0 1
        %188 = vperm.xlu0 %187, %v143
        %v189 = vpop.permute.xlu0 %188
        %v191 = vadd.f32 %v175, %v185
        %v192 = vadd.f32 %v176, %v185
        %v193 = vadd.f32 %v177, %v185
        %v194 = vadd.f32 %v178, %v185
        %v195 = vadd.f32 %v179, %v189
        %v196 = vadd.f32 %v180, %v189
        %v197 = vadd.f32 %v181, %v189
        %v198 = vadd.f32 %v182, %v189
        %v199 = vtanh.pop %v191
        %v200 = vtanh.pop %v192
        %v201 = vtanh.pop %v193
        %v202 = vtanh.pop %v194
        %v203 = vtanh.pop %v195
        %v204 = vtanh.pop %v196
        %v205 = vtanh.pop %v197
        %v206 = vtanh.pop %v198
        %208 = vset.pattern.permute.xlu0 16
        %209 = vperm.xlu0 %208, %v144
        %v210 = vpop.permute.xlu0 %209
        %213 = vset.pattern.permute.xlu0 16
        %214 = vperm.xlu0 %213, %v145
        %v215 = vpop.permute.xlu0 %214
        %218 = vset.pattern.permute.xlu0 16
        %219 = vperm.xlu0 %218, %v146
        %v220 = vpop.permute.xlu0 %219
        %223 = vset.pattern.permute.xlu0 16
        %224 = vperm.xlu0 %223, %v147
        %v225 = vpop.permute.xlu0 %224
        %vm227 = vcmask 130048
        %v228 = vsel %vm227, %v144, 0
        %v230 = vsel %vm227, %v145, 0
        %v232 = vsel %vm227, %v146, 0
        %v234 = vsel %vm227, %v147, 0
        %236 = vmatpush.msra.mxu0 0.0
        %237 = vmatpush.msra.mxu0 0.0
        %238 = vmatpush.msra.mxu0 0.0
        %239 = vmatpush.msra.mxu0 0.0
        %240 = vmatpush.msra.mxu0 0.0
        %241 = vmatpush.msra.mxu0 0.0
        %242 = vmatpush.msra.mxu0 0.0
        %243 = vmatpush.msra.mxu0 0.0
        %244 = vmatpush.msra.mxu0 0.0
        %245 = vmatpush.msra.mxu0 0.0
        %246 = vmatpush.msra.mxu0 0.0
        %247 = vmatpush.msra.mxu0 0.0
        %248 = vmatpush.msra.mxu0 0.0
        %249 = vmatpush.msra.mxu0 0.0
        %250 = vmatpush.msra.mxu0 %v203
        %251 = vmatpush.msra.mxu0 %v199
        %252 = vmatmul.f32.gmra.mxu0 %v228
        %v253 = vpop.f32.mrf.mxu0
        %v254 = vadd.f32 %v210, %v253
        %255 = vmatmul.f32.gmra.mxu0 %v230
        %v256 = vpop.f32.mrf.mxu0
        %v257 = vadd.f32 %v215, %v256
        %258 = vmatmul.f32.gmra.mxu0 %v232
        %v259 = vpop.f32.mrf.mxu0
        %v260 = vadd.f32 %v220, %v259
        %261 = vmatmul.f32.gmra.mxu0 %v234
        %v262 = vpop.f32.mrf.mxu0
        %v263 = vadd.f32 %v225, %v262
        %264 = vdwg.mxu0
        %265 = vmatpush.msra.mxu0 0.0
        %266 = vmatpush.msra.mxu0 0.0
        %267 = vmatpush.msra.mxu0 0.0
        %268 = vmatpush.msra.mxu0 0.0
        %269 = vmatpush.msra.mxu0 0.0
        %270 = vmatpush.msra.mxu0 0.0
        %271 = vmatpush.msra.mxu0 0.0
        %272 = vmatpush.msra.mxu0 0.0
        %273 = vmatpush.msra.mxu0 0.0
        %274 = vmatpush.msra.mxu0 0.0
        %275 = vmatpush.msra.mxu0 0.0
        %276 = vmatpush.msra.mxu0 0.0
        %277 = vmatpush.msra.mxu0 0.0
        %278 = vmatpush.msra.mxu0 0.0
        %279 = vmatpush.msra.mxu0 %v204
        %280 = vmatpush.msra.mxu0 %v200
        %281 = vmatmul.f32.gmra.mxu0 %v228
        %v282 = vpop.f32.mrf.mxu0
        %v283 = vadd.f32 %v210, %v282
        %284 = vmatmul.f32.gmra.mxu0 %v230
        %v285 = vpop.f32.mrf.mxu0
        %v286 = vadd.f32 %v215, %v285
        %287 = vmatmul.f32.gmra.mxu0 %v232
        %v288 = vpop.f32.mrf.mxu0
        %v289 = vadd.f32 %v220, %v288
        %290 = vmatmul.f32.gmra.mxu0 %v234
        %v291 = vpop.f32.mrf.mxu0
        %v292 = vadd.f32 %v225, %v291
        %293 = vdwg.mxu0
        %294 = vmatpush.msra.mxu0 0.0
        %295 = vmatpush.msra.mxu0 0.0
        %296 = vmatpush.msra.mxu0 0.0
        %297 = vmatpush.msra.mxu0 0.0
        %298 = vmatpush.msra.mxu0 0.0
        %299 = vmatpush.msra.mxu0 0.0
        %300 = vmatpush.msra.mxu0 0.0
        %301 = vmatpush.msra.mxu0 0.0
        %302 = vmatpush.msra.mxu0 0.0
        %303 = vmatpush.msra.mxu0 0.0
        %304 = vmatpush.msra.mxu0 0.0
        %305 = vmatpush.msra.mxu0 0.0
        %306 = vmatpush.msra.mxu0 0.0
        %307 = vmatpush.msra.mxu0 0.0
        %308 = vmatpush.msra.mxu0 %v205
        %309 = vmatpush.msra.mxu0 %v201
        %310 = vmatmul.f32.gmra.mxu0 %v228
        %v311 = vpop.f32.mrf.mxu0
        %v312 = vadd.f32 %v210, %v311
        %313 = vmatmul.f32.gmra.mxu0 %v230
        %v314 = vpop.f32.mrf.mxu0
        %v315 = vadd.f32 %v215, %v314
        %316 = vmatmul.f32.gmra.mxu0 %v232
        %v317 = vpop.f32.mrf.mxu0
        %v318 = vadd.f32 %v220, %v317
        %319 = vmatmul.f32.gmra.mxu0 %v234
        %v320 = vpop.f32.mrf.mxu0
        %v321 = vadd.f32 %v225, %v320
        %322 = vdwg.mxu0
        %323 = vmatpush.msra.mxu0 0.0
        %324 = vmatpush.msra.mxu0 0.0
        %325 = vmatpush.msra.mxu0 0.0
        %326 = vmatpush.msra.mxu0 0.0
        %327 = vmatpush.msra.mxu0 0.0
        %328 = vmatpush.msra.mxu0 0.0
        %329 = vmatpush.msra.mxu0 0.0
        %330 = vmatpush.msra.mxu0 0.0
        %331 = vmatpush.msra.mxu0 0.0
        %332 = vmatpush.msra.mxu0 0.0
        %333 = vmatpush.msra.mxu0 0.0
        %334 = vmatpush.msra.mxu0 0.0
        %335 = vmatpush.msra.mxu0 0.0
        %336 = vmatpush.msra.mxu0 0.0
        %337 = vmatpush.msra.mxu0 %v206
        %338 = vmatpush.msra.mxu0 %v202
        %339 = vmatmul.f32.gmra.mxu0 %v228
        %v340 = vpop.f32.mrf.mxu0
        %v341 = vadd.f32 %v210, %v340
        %342 = vmatmul.f32.gmra.mxu0 %v230
        %v343 = vpop.f32.mrf.mxu0
        %v344 = vadd.f32 %v215, %v343
        %345 = vmatmul.f32.gmra.mxu0 %v232
        %v346 = vpop.f32.mrf.mxu0
        %v347 = vadd.f32 %v220, %v346
        %348 = vmatmul.f32.gmra.mxu0 %v234
        %v349 = vpop.f32.mrf.mxu0
        %v350 = vadd.f32 %v225, %v349
        %351 = vdwg.mxu0
        %v352 = vtanh.pop %v254
        %v353 = vtanh.pop %v283
        %v354 = vtanh.pop %v312
        %v355 = vtanh.pop %v341
        %v356 = vtanh.pop %v257
        %v357 = vtanh.pop %v286
        %v358 = vtanh.pop %v315
        %v359 = vtanh.pop %v344
        %v360 = vtanh.pop %v260
        %v361 = vtanh.pop %v289
        %v362 = vtanh.pop %v318
        %v363 = vtanh.pop %v347
        %v364 = vtanh.pop %v263
        %v365 = vtanh.pop %v292
        %v366 = vtanh.pop %v321
        %v367 = vtanh.pop %v350
        %369 = vset.pattern.permute.xlu0 32
        %370 = vperm.xlu0 %369, %v148
        %v371 = vpop.permute.xlu0 %370
        %374 = vset.pattern.permute.xlu0 32
        %375 = vperm.xlu0 %374, %v149
        %v376 = vpop.permute.xlu0 %375
        %379 = vset.pattern.permute.xlu0 32
        %380 = vperm.xlu0 %379, %v150
        %v381 = vpop.permute.xlu0 %380
        %384 = vset.pattern.permute.xlu0 32
        %385 = vperm.xlu0 %384, %v151
        %v386 = vpop.permute.xlu0 %385
        %vm388 = vcmask 261120
        %v389 = vsel %vm388, %v148, 0
        %v391 = vsel %vm388, %v149, 0
        %v393 = vsel %vm388, %v150, 0
        %v395 = vsel %vm388, %v151, 0
        %397 = vmatpush.msra.mxu0 0.0
        %398 = vmatpush.msra.mxu0 0.0
        %399 = vmatpush.msra.mxu0 0.0
        %400 = vmatpush.msra.mxu0 0.0
        %401 = vmatpush.msra.mxu0 0.0
        %402 = vmatpush.msra.mxu0 0.0
        %403 = vmatpush.msra.mxu0 0.0
        %404 = vmatpush.msra.mxu0 0.0
        %405 = vmatpush.msra.mxu0 0.0
        %406 = vmatpush.msra.mxu0 0.0
        %407 = vmatpush.msra.mxu0 0.0
        %408 = vmatpush.msra.mxu0 0.0
        %409 = vmatpush.msra.mxu0 %v364
        %410 = vmatpush.msra.mxu0 %v360
        %411 = vmatpush.msra.mxu0 %v356
        %412 = vmatpush.msra.mxu0 %v352
        %413 = vmatmul.f32.gmra.mxu0 %v389
        %v414 = vpop.f32.mrf.mxu0
        %v415 = vadd.f32 %v371, %v414
        %416 = vmatmul.f32.gmra.mxu0 %v391
        %v417 = vpop.f32.mrf.mxu0
        %v418 = vadd.f32 %v376, %v417
        %419 = vmatmul.f32.gmra.mxu0 %v393
        %v420 = vpop.f32.mrf.mxu0
        %v421 = vadd.f32 %v381, %v420
        %422 = vmatmul.f32.gmra.mxu0 %v395
        %v423 = vpop.f32.mrf.mxu0
        %v424 = vadd.f32 %v386, %v423
        %425 = vdwg.mxu0
        %426 = vmatpush.msra.mxu0 0.0
        %427 = vmatpush.msra.mxu0 0.0
        %428 = vmatpush.msra.mxu0 0.0
        %429 = vmatpush.msra.mxu0 0.0
        %430 = vmatpush.msra.mxu0 0.0
        %431 = vmatpush.msra.mxu0 0.0
        %432 = vmatpush.msra.mxu0 0.0
        %433 = vmatpush.msra.mxu0 0.0
        %434 = vmatpush.msra.mxu0 0.0
        %435 = vmatpush.msra.mxu0 0.0
        %436 = vmatpush.msra.mxu0 0.0
        %437 = vmatpush.msra.mxu0 0.0
        %438 = vmatpush.msra.mxu0 %v365
        %439 = vmatpush.msra.mxu0 %v361
        %440 = vmatpush.msra.mxu0 %v357
        %441 = vmatpush.msra.mxu0 %v353
        %442 = vmatmul.f32.gmra.mxu0 %v389
        %v443 = vpop.f32.mrf.mxu0
        %v444 = vadd.f32 %v371, %v443
        %445 = vmatmul.f32.gmra.mxu0 %v391
        %v446 = vpop.f32.mrf.mxu0
        %v447 = vadd.f32 %v376, %v446
        %448 = vmatmul.f32.gmra.mxu0 %v393
        %v449 = vpop.f32.mrf.mxu0
        %v450 = vadd.f32 %v381, %v449
        %451 = vmatmul.f32.gmra.mxu0 %v395
        %v452 = vpop.f32.mrf.mxu0
        %v453 = vadd.f32 %v386, %v452
        %454 = vdwg.mxu0
        %455 = vmatpush.msra.mxu0 0.0
        %456 = vmatpush.msra.mxu0 0.0
        %457 = vmatpush.msra.mxu0 0.0
        %458 = vmatpush.msra.mxu0 0.0
        %459 = vmatpush.msra.mxu0 0.0
        %460 = vmatpush.msra.mxu0 0.0
        %461 = vmatpush.msra.mxu0 0.0
        %462 = vmatpush.msra.mxu0 0.0
        %463 = vmatpush.msra.mxu0 0.0
        %464 = vmatpush.msra.mxu0 0.0
        %465 = vmatpush.msra.mxu0 0.0
        %466 = vmatpush.msra.mxu0 0.0
        %467 = vmatpush.msra.mxu0 %v366
        %468 = vmatpush.msra.mxu0 %v362
        %469 = vmatpush.msra.mxu0 %v358
        %470 = vmatpush.msra.mxu0 %v354
        %471 = vmatmul.f32.gmra.mxu0 %v389
        %v472 = vpop.f32.mrf.mxu0
        %v473 = vadd.f32 %v371, %v472
        %474 = vmatmul.f32.gmra.mxu0 %v391
        %v475 = vpop.f32.mrf.mxu0
        %v476 = vadd.f32 %v376, %v475
        %477 = vmatmul.f32.gmra.mxu0 %v393
        %v478 = vpop.f32.mrf.mxu0
        %v479 = vadd.f32 %v381, %v478
        %480 = vmatmul.f32.gmra.mxu0 %v395
        %v481 = vpop.f32.mrf.mxu0
        %v482 = vadd.f32 %v386, %v481
        %483 = vdwg.mxu0
        %484 = vmatpush.msra.mxu0 0.0
        %485 = vmatpush.msra.mxu0 0.0
        %486 = vmatpush.msra.mxu0 0.0
        %487 = vmatpush.msra.mxu0 0.0
        %488 = vmatpush.msra.mxu0 0.0
        %489 = vmatpush.msra.mxu0 0.0
        %490 = vmatpush.msra.mxu0 0.0
        %491 = vmatpush.msra.mxu0 0.0
        %492 = vmatpush.msra.mxu0 0.0
        %493 = vmatpush.msra.mxu0 0.0
        %494 = vmatpush.msra.mxu0 0.0
        %495 = vmatpush.msra.mxu0 0.0
        %496 = vmatpush.msra.mxu0 %v367
        %497 = vmatpush.msra.mxu0 %v363
        %498 = vmatpush.msra.mxu0 %v359
        %499 = vmatpush.msra.mxu0 %v355
        %500 = vmatmul.f32.gmra.mxu0 %v389
        %v501 = vpop.f32.mrf.mxu0
        %v502 = vadd.f32 %v371, %v501
        %503 = vmatmul.f32.gmra.mxu0 %v391
        %v504 = vpop.f32.mrf.mxu0
        %v505 = vadd.f32 %v376, %v504
        %506 = vmatmul.f32.gmra.mxu0 %v393
        %v507 = vpop.f32.mrf.mxu0
        %v508 = vadd.f32 %v381, %v507
        %509 = vmatmul.f32.gmra.mxu0 %v395
        %v510 = vpop.f32.mrf.mxu0
        %v511 = vadd.f32 %v386, %v510
        %512 = vdwg.mxu0
        %v513 = vtanh.pop %v415
        %v514 = vtanh.pop %v444
        %v515 = vtanh.pop %v473
        %v516 = vtanh.pop %v502
        %v517 = vtanh.pop %v418
        %v518 = vtanh.pop %v447
        %v519 = vtanh.pop %v476
        %v520 = vtanh.pop %v505
        %v521 = vtanh.pop %v421
        %v522 = vtanh.pop %v450
        %v523 = vtanh.pop %v479
        %v524 = vtanh.pop %v508
        %v525 = vtanh.pop %v424
        %v526 = vtanh.pop %v453
        %v527 = vtanh.pop %v482
        %v528 = vtanh.pop %v511
        %530 = vset.pattern.permute.xlu0 32
        %531 = vperm.xlu0 %530, %v152
        %v532 = vpop.permute.xlu0 %531
        %535 = vset.pattern.permute.xlu0 32
        %536 = vperm.xlu0 %535, %v153
        %v537 = vpop.permute.xlu0 %536
        %v539 = vsel %vm388, %v152, 0
        %v541 = vsel %vm388, %v153, 0
        %543 = vmatpush.msra.mxu0 0.0
        %544 = vmatpush.msra.mxu0 0.0
        %545 = vmatpush.msra.mxu0 0.0
        %546 = vmatpush.msra.mxu0 0.0
        %547 = vmatpush.msra.mxu0 0.0
        %548 = vmatpush.msra.mxu0 0.0
        %549 = vmatpush.msra.mxu0 0.0
        %550 = vmatpush.msra.mxu0 0.0
        %551 = vmatpush.msra.mxu0 0.0
        %552 = vmatpush.msra.mxu0 0.0
        %553 = vmatpush.msra.mxu0 0.0
        %554 = vmatpush.msra.mxu0 0.0
        %555 = vmatpush.msra.mxu0 %v525
        %556 = vmatpush.msra.mxu0 %v521
        %557 = vmatpush.msra.mxu0 %v517
        %558 = vmatpush.msra.mxu0 %v513
        %559 = vmatmul.f32.gmra.mxu0 %v539
        %v560 = vpop.f32.mrf.mxu0
        %v561 = vadd.f32 %v532, %v560
        %562 = vmatmul.f32.gmra.mxu0 %v541
        %v563 = vpop.f32.mrf.mxu0
        %v564 = vadd.f32 %v537, %v563
        %565 = vdwg.mxu0
        %566 = vmatpush.msra.mxu0 0.0
        %567 = vmatpush.msra.mxu0 0.0
        %568 = vmatpush.msra.mxu0 0.0
        %569 = vmatpush.msra.mxu0 0.0
        %570 = vmatpush.msra.mxu0 0.0
        %571 = vmatpush.msra.mxu0 0.0
        %572 = vmatpush.msra.mxu0 0.0
        %573 = vmatpush.msra.mxu0 0.0
        %574 = vmatpush.msra.mxu0 0.0
        %575 = vmatpush.msra.mxu0 0.0
        %576 = vmatpush.msra.mxu0 0.0
        %577 = vmatpush.msra.mxu0 0.0
        %578 = vmatpush.msra.mxu0 %v526
        %579 = vmatpush.msra.mxu0 %v522
        %580 = vmatpush.msra.mxu0 %v518
        %581 = vmatpush.msra.mxu0 %v514
        %582 = vmatmul.f32.gmra.mxu0 %v539
        %v583 = vpop.f32.mrf.mxu0
        %v584 = vadd.f32 %v532, %v583
        %585 = vmatmul.f32.gmra.mxu0 %v541
        %v586 = vpop.f32.mrf.mxu0
        %v587 = vadd.f32 %v537, %v586
        %588 = vdwg.mxu0
        %589 = vmatpush.msra.mxu0 0.0
        %590 = vmatpush.msra.mxu0 0.0
        %591 = vmatpush.msra.mxu0 0.0
        %592 = vmatpush.msra.mxu0 0.0
        %593 = vmatpush.msra.mxu0 0.0
        %594 = vmatpush.msra.mxu0 0.0
        %595 = vmatpush.msra.mxu0 0.0
        %596 = vmatpush.msra.mxu0 0.0
        %597 = vmatpush.msra.mxu0 0.0
        %598 = vmatpush.msra.mxu0 0.0
        %599 = vmatpush.msra.mxu0 0.0
        %600 = vmatpush.msra.mxu0 0.0
        %601 = vmatpush.msra.mxu0 %v527
        %602 = vmatpush.msra.mxu0 %v523
        %603 = vmatpush.msra.mxu0 %v519
        %604 = vmatpush.msra.mxu0 %v515
        %605 = vmatmul.f32.gmra.mxu0 %v539
        %v606 = vpop.f32.mrf.mxu0
        %v607 = vadd.f32 %v532, %v606
        %608 = vmatmul.f32.gmra.mxu0 %v541
        %v609 = vpop.f32.mrf.mxu0
        %v610 = vadd.f32 %v537, %v609
        %611 = vdwg.mxu0
        %612 = vmatpush.msra.mxu0 0.0
        %613 = vmatpush.msra.mxu0 0.0
        %614 = vmatpush.msra.mxu0 0.0
        %615 = vmatpush.msra.mxu0 0.0
        %616 = vmatpush.msra.mxu0 0.0
        %617 = vmatpush.msra.mxu0 0.0
        %618 = vmatpush.msra.mxu0 0.0
        %619 = vmatpush.msra.mxu0 0.0
        %620 = vmatpush.msra.mxu0 0.0
        %621 = vmatpush.msra.mxu0 0.0
        %622 = vmatpush.msra.mxu0 0.0
        %623 = vmatpush.msra.mxu0 0.0
        %624 = vmatpush.msra.mxu0 %v528
        %625 = vmatpush.msra.mxu0 %v524
        %626 = vmatpush.msra.mxu0 %v520
        %627 = vmatpush.msra.mxu0 %v516
        %628 = vmatmul.f32.gmra.mxu0 %v539
        %v629 = vpop.f32.mrf.mxu0
        %v630 = vadd.f32 %v532, %v629
        %631 = vmatmul.f32.gmra.mxu0 %v541
        %v632 = vpop.f32.mrf.mxu0
        %v633 = vadd.f32 %v537, %v632
        %634 = vdwg.mxu0
        %v635 = vtanh.pop %v561
        %v636 = vtanh.pop %v584
        %v637 = vtanh.pop %v607
        %v638 = vtanh.pop %v630
        %v639 = vtanh.pop %v564
        %v640 = vtanh.pop %v587
        %v641 = vtanh.pop %v610
        %v642 = vtanh.pop %v633
        %644 = vset.pattern.permute.xlu0 16
        %645 = vperm.xlu0 %644, %v154
        %v646 = vpop.permute.xlu0 %645
        %v648 = vsel %vm227, %v154, 0
        %650 = vmatpush.msra.mxu0 0.0
        %651 = vmatpush.msra.mxu0 0.0
        %652 = vmatpush.msra.mxu0 0.0
        %653 = vmatpush.msra.mxu0 0.0
        %654 = vmatpush.msra.mxu0 0.0
        %655 = vmatpush.msra.mxu0 0.0
        %656 = vmatpush.msra.mxu0 0.0
        %657 = vmatpush.msra.mxu0 0.0
        %658 = vmatpush.msra.mxu0 0.0
        %659 = vmatpush.msra.mxu0 0.0
        %660 = vmatpush.msra.mxu0 0.0
        %661 = vmatpush.msra.mxu0 0.0
        %662 = vmatpush.msra.mxu0 0.0
        %663 = vmatpush.msra.mxu0 0.0
        %664 = vmatpush.msra.mxu0 %v639
        %665 = vmatpush.msra.mxu0 %v635
        %666 = vmatmul.f32.gmra.mxu0 %v648
        %v667 = vpop.f32.mrf.mxu0
        %v668 = vadd.f32 %v646, %v667
        %669 = vdwg.mxu0
        %670 = vmatpush.msra.mxu0 0.0
        %671 = vmatpush.msra.mxu0 0.0
        %672 = vmatpush.msra.mxu0 0.0
        %673 = vmatpush.msra.mxu0 0.0
        %674 = vmatpush.msra.mxu0 0.0
        %675 = vmatpush.msra.mxu0 0.0
        %676 = vmatpush.msra.mxu0 0.0
        %677 = vmatpush.msra.mxu0 0.0
        %678 = vmatpush.msra.mxu0 0.0
        %679 = vmatpush.msra.mxu0 0.0
        %680 = vmatpush.msra.mxu0 0.0
        %681 = vmatpush.msra.mxu0 0.0
        %682 = vmatpush.msra.mxu0 0.0
        %683 = vmatpush.msra.mxu0 0.0
        %684 = vmatpush.msra.mxu0 %v640
        %685 = vmatpush.msra.mxu0 %v636
        %686 = vmatmul.f32.gmra.mxu0 %v648
        %v687 = vpop.f32.mrf.mxu0
        %v688 = vadd.f32 %v646, %v687
        %689 = vdwg.mxu0
        %690 = vmatpush.msra.mxu0 0.0
        %691 = vmatpush.msra.mxu0 0.0
        %692 = vmatpush.msra.mxu0 0.0
        %693 = vmatpush.msra.mxu0 0.0
        %694 = vmatpush.msra.mxu0 0.0
        %695 = vmatpush.msra.mxu0 0.0
        %696 = vmatpush.msra.mxu0 0.0
        %697 = vmatpush.msra.mxu0 0.0
        %698 = vmatpush.msra.mxu0 0.0
        %699 = vmatpush.msra.mxu0 0.0
        %700 = vmatpush.msra.mxu0 0.0
        %701 = vmatpush.msra.mxu0 0.0
        %702 = vmatpush.msra.mxu0 0.0
        %703 = vmatpush.msra.mxu0 0.0
        %704 = vmatpush.msra.mxu0 %v641
        %705 = vmatpush.msra.mxu0 %v637
        %706 = vmatmul.f32.gmra.mxu0 %v648
        %v707 = vpop.f32.mrf.mxu0
        %v708 = vadd.f32 %v646, %v707
        %709 = vdwg.mxu0
        %710 = vmatpush.msra.mxu0 0.0
        %711 = vmatpush.msra.mxu0 0.0
        %712 = vmatpush.msra.mxu0 0.0
        %713 = vmatpush.msra.mxu0 0.0
        %714 = vmatpush.msra.mxu0 0.0
        %715 = vmatpush.msra.mxu0 0.0
        %716 = vmatpush.msra.mxu0 0.0
        %717 = vmatpush.msra.mxu0 0.0
        %718 = vmatpush.msra.mxu0 0.0
        %719 = vmatpush.msra.mxu0 0.0
        %720 = vmatpush.msra.mxu0 0.0
        %721 = vmatpush.msra.mxu0 0.0
        %722 = vmatpush.msra.mxu0 0.0
        %723 = vmatpush.msra.mxu0 0.0
        %724 = vmatpush.msra.mxu0 %v642
        %725 = vmatpush.msra.mxu0 %v638
        %726 = vmatmul.f32.gmra.mxu0 %v648
        %v727 = vpop.f32.mrf.mxu0
        %v728 = vadd.f32 %v646, %v727
        %729 = vdwg.mxu0
        %v730 = vtanh.pop %v668
        %v731 = vtanh.pop %v688
        %v732 = vtanh.pop %v708
        %v733 = vtanh.pop %v728
        %v738 = vrot.slane %v731, 4
        %v739 = vrot.slane %v733, 4
        %vm740 = vcmask 1043456
        %v741 = vsel %vm740, %v730, %v738
        %v742 = vsel %vm740, %v732, %v739
        %745 = vst [vmem:[%s135] sm:$0x77] %v741
        %746 = vst [vmem:[%s135 + $0x8] sm:$0x77] %v742
        %s747 = sand.u32 %s71, 1
        %s748 = scalar_lea.sflag [#allocation3], %s747
        %s749 = sand.u32 %s71, 1
        %s750 = smul.addr %s749, 16
        %s751 = scalar_lea.vmem [#allocation2], %s750
        // Predicated region
        $region29: #{tpu_custom_call.1} parent=27 // pred_check
          %p752 = pneg %p81
        $region30: #{tpu_custom_call.1} parent=27 // pred_check_branch
          %754 = sbr.rel (%p752) target = $region32
        $region31: #{tpu_custom_call.1} parent=27 // pred_region
          %s755 = smul.u32 4, %s16
          %757 = vsyncadd %s748, 0
          %s758 = smul.addr %s755, 4
          %s759 = scalar_lea.hbm %s2, %s758
          %s761 = sshll.u32 %s751, 4
          %s762 = int_to_ptr.vmem [resolvable:$true] %s761
          %s763 = sshll.u32 %s759, 4
          %s764 = int_to_ptr.hbm [resolvable:$true] %s763
          %766 = dma.vmem_to_hbm [thread:$0]  %s762, 256, %s764, %s748
        $region32: #{tpu_custom_call.1} parent=27 // pred_fallthru
          _
      $region28: #{tpu_custom_call.1} parent=5 // pred_fallthru
        _
      %p767 = scmp.le.s32.totalorder 2, %s11
      // Predicated region
      $region33: #{tpu_custom_call.1} parent=5 // pred_check
        %p768 = pneg %p767
      $region34: #{tpu_custom_call.1} parent=5 // pred_check_branch
        %770 = sbr.rel (%p768) target = $region36
      $region35: #{tpu_custom_call.1} parent=5 // pred_region
        %s771 = ssub.s32 %s11, 2
        // Predicated region
        $region37: #{tpu_custom_call.1} parent=35 // pred_check
          %p772 = pneg %p87
        $region38: #{tpu_custom_call.1} parent=35 // pred_check_branch
          %774 = sbr.rel (%p772) target = $region40
        $region39: #{tpu_custom_call.1} parent=35 // pred_region
          %s775 = sand.u32 %s72, 1
          %s776 = scalar_lea.sflag [#allocation3], %s775
          %s777 = sand.u32 %s72, 1
          %s778 = smul.addr %s777, 16
          %s779 = scalar_lea.vmem [#allocation2], %s778
          %781 = dma.done %s776, 256
        $region40: #{tpu_custom_call.1} parent=35 // pred_fallthru
          _
      $region36: #{tpu_custom_call.1} parent=5 // pred_fallthru
        _
    $region6: #{tpu_custom_call.1} parent=1 // loop_footer
      %s15 = sadd.s32 1, %s11
    $region7: #{tpu_custom_call.1} parent=1 // loop_footer_branch
      %10 = sbr.rel target = $region3
    $region8: #{tpu_custom_call.1} parent=1 // loop_exit
      _
    %782 = vsyncpa [#allocation3], 1
    %s783 = scalar_lea.sflag [#allocation3], 1
    %784 = vsyncpa %s783, 1

</llo_original>
